<compile_context>
chip_gen: v5e
topology: v5e:2x2
jax: 0.10.0
libtpu: 0.0.40
codegen_flags: <defaults>
</compile_context>

<pallas_src>
import math
from functools import partial

import jax
import jax.numpy as jnp
from jax import lax
from jax.experimental import pallas as pl
from jax.experimental.pallas import tpu as pltpu

_NEG_INF = -1e9
_VMEM_LIMIT_CACHE = None


def _vmem_limit_bytes():
    """~75% of physical VMEM (v5e/v6e ~96 MiB, v7x ~48 MiB); safe fallback."""
    global _VMEM_LIMIT_CACHE
    if _VMEM_LIMIT_CACHE is None:
        try:
            cap = pltpu.get_tpu_info().vmem_capacity_bytes
            _VMEM_LIMIT_CACHE = (int(cap) * 3) // 4
        except Exception:
            _VMEM_LIMIT_CACHE = 48 * 1024 * 1024
    return _VMEM_LIMIT_CACHE


def _pick_tile(dim, candidates):
    """Largest MXU-aligned tile that divides `dim`, else the full extent."""
    for c in candidates:
        if dim >= c and dim % c == 0:
            return c
    return dim


# ----------------------------------------------------------------------------
# Tiled linear:  y = x @ W + b     (x f32 (M,K), W bf16 (K,N), b f32 (N,))
# bf16 MXU operands, f32 VMEM accumulator, K trailing "arbitrary" axis.
# ----------------------------------------------------------------------------
def _linear_kernel(x_ref, w_ref, b_ref, o_ref, acc_ref):
    k = pl.program_id(2)

    @pl.when(k == 0)
    def _():
        acc_ref[...] = jnp.zeros_like(acc_ref)

    acc_ref[...] += jnp.dot(
        x_ref[...].astype(jnp.bfloat16),
        w_ref[...].astype(jnp.bfloat16),
        preferred_element_type=jnp.float32,
    )

    @pl.when(k == pl.num_programs(2) - 1)
    def _():
        o_ref[...] = (acc_ref[...] + b_ref[...]).astype(o_ref.dtype)


def linear_pallas(x, w, b, *, out_dtype=jnp.bfloat16):
    M, K = x.shape
    Kw, N = w.shape
    assert K == Kw
    vmem_budget = _vmem_limit_bytes()

    tk = _pick_tile(K, (512, 256, 128))
    tn = _pick_tile(N, (512, 256, 128))
    out_bytes = jnp.dtype(out_dtype).itemsize

    # Larger M tiles amortize the ~0.35us per-grid-step overhead (plenty of
    # headroom on v5e/v6e); clamp so the double-buffered working set stays well
    # inside the scoped budget (matters on v7x's 64 MiB VMEM).
    tm = None
    for c in (1024, 512, 256, 128):
        if M >= c and M % c == 0:
            footprint = (2 * (c * tk * 4 + tk * tn * 2 + tn * 4)
                         + c * tn * (4 + 2 * out_bytes))
            if footprint <= vmem_budget // 2:
                tm = c
                break
    if tm is None:
        tm = _pick_tile(M, (128,))

    grid = (M // tm, N // tn, K // tk)

    return pl.pallas_call(
        _linear_kernel,
        out_shape=jax.ShapeDtypeStruct((M, N), out_dtype),
        grid=grid,
        in_specs=[
            pl.BlockSpec((tm, tk), lambda i, j, k: (i, k)),
            pl.BlockSpec((tk, tn), lambda i, j, k: (k, j)),
            pl.BlockSpec((1, tn), lambda i, j, k: (0, j)),
        ],
        out_specs=pl.BlockSpec((tm, tn), lambda i, j, k: (i, j)),
        scratch_shapes=[pltpu.VMEM((tm, tn), jnp.float32)],
        compiler_params=pltpu.CompilerParams(
            dimension_semantics=("parallel", "parallel", "arbitrary"),
            vmem_limit_bytes=vmem_budget,
        ),
        cost_estimate=pl.CostEstimate(
            flops=2 * M * N * K,
            transcendentals=0,
            bytes_accessed=4 * M * K + 2 * K * N + 4 * N + out_bytes * M * N,
        ),
    )(x, w, b.reshape(1, N))


# ----------------------------------------------------------------------------
# Attention kernel (per (batch, q-tile) grid step, all heads handled inside).
#   q block (1,tq,D) bf16, k/v blocks (1,Sk,D) bf16 (column-block of a fused
#   QKV/KV array or a standalone array), additive f32 mask block, W_out (D,D)
#   bf16 + b_out (1,D) f32 grid-resident.  Output block (1,tq,D) f32 already
#   projected through W_out (output projection fused, no concatenate).
#   1/sqrt(d_k) is folded into the Q projection weights ahead of time.
# ----------------------------------------------------------------------------
def _mha_attention_kernel(q_ref, k_ref, v_ref, m_ref, wo_ref, bo_ref, o_ref, *,
                          num_heads):
    q = q_ref[0]          # (tq, D)  bf16
    k = k_ref[0]          # (Sk, D)  bf16
    v = v_ref[0]          # (Sk, D)  bf16
    madd = m_ref[0]       # (Sm, Sk) f32 additive mask (0 / -1e9), compare hoisted

    D = q.shape[-1]
    d_k = D // num_heads

    for h in range(num_heads):
        sl = slice(h * d_k, (h + 1) * d_k)        # static feature slice
        qh, kh, vh = q[:, sl], k[:, sl], v[:, sl]

        # scores = qh @ kh^T (contract d_k directly; no transposed-K copy).
        s = lax.dot_general(qh, kh, (((1,), (1,)), ((), ())),
                            preferred_element_type=jnp.float32)   # (tq, Sk) f32
        s = s + madd                                              # mask add (f32)

        # Numerically-stable softmax in f32; reciprocal on the EUP slot.
        s = s - jnp.max(s, axis=-1, keepdims=True)
        p = jnp.exp(s)
        p = p * pl.reciprocal(jnp.sum(p, axis=-1, keepdims=True), approx=True)

        ctx = jnp.dot(p.astype(jnp.bfloat16), vh,
                      preferred_element_type=jnp.float32)         # (tq, d_k)

        # Fused output projection: ctx_h @ W_out[h*d_k:(h+1)*d_k, :] accumulated
        # straight into the lane-dense (tq, D) f32 output block.
        proj = jnp.dot(ctx.astype(jnp.bfloat16), wo_ref[sl, :],
                       preferred_element_type=jnp.float32)        # (tq, D)
        if h == 0:
            o_ref[0] = proj + bo_ref[...]
        else:
            o_ref[0] += proj


def _q_spec(tq, D, col):
    return pl.BlockSpec((1, tq, D), lambda b, qi: (b, qi, col))


def _kv_spec(Sk, D, col):
    return pl.BlockSpec((1, Sk, D), lambda b, qi: (b, 0, col))


def attention_pallas(q_in, k_in, v_in, mask_add, wo_bf16, b_out, *, num_heads,
                     d_model, q_col=0, k_col=0, v_col=0):
    """q_in:(B,Sq,*), k_in/v_in:(B,Sk,*) bf16 where '*' is a multiple of
    d_model; q/k/v live at column block q_col/k_col/v_col (so fused QKV / KV
    projections are consumed without wrapper slicing). mask_add:(B,Sm,Sk) f32
    additive mask with Sm in {1, Sq}. Returns (B,Sq,D) f32 already projected
    through W_out."""
    B, Sq = q_in.shape[0], q_in.shape[1]
    Sk = k_in.shape[1]
    D = d_model
    Sm = mask_add.shape[1]
    assert Sm in (1, Sq)

    tq = _pick_tile(Sq, (256, 128))
    grid = (B, Sq // tq)

    if Sm == 1:
        m_spec = pl.BlockSpec((1, 1, Sk), lambda b, qi: (b, 0, 0))
    else:
        m_spec = pl.BlockSpec((1, tq, Sk), lambda b, qi: (b, qi, 0))

    kernel = partial(_mha_attention_kernel, num_heads=num_heads)

    return pl.pallas_call(
        kernel,
        out_shape=jax.ShapeDtypeStruct((B, Sq, D), jnp.float32),
        grid=grid,
        in_specs=[
            _q_spec(tq, D, q_col),
            _kv_spec(Sk, D, k_col),
            _kv_spec(Sk, D, v_col),
            m_spec,
            pl.BlockSpec((D, D), lambda b, qi: (0, 0)),   # W_out (grid-resident)
            pl.BlockSpec((1, D), lambda b, qi: (0, 0)),   # b_out
        ],
        out_specs=pl.BlockSpec((1, tq, D), lambda b, qi: (b, qi, 0)),
        compiler_params=pltpu.CompilerParams(
            dimension_semantics=("parallel", "parallel"),
            vmem_limit_bytes=_vmem_limit_bytes(),
        ),
        cost_estimate=pl.CostEstimate(
            flops=B * (4 * Sq * Sk * D + 2 * Sq * D * D),
            transcendentals=B * num_heads * Sq * Sk,
            bytes_accessed=(2 * B * (Sq + 2 * Sk) * D + 4 * B * Sm * Sk
                            + 2 * D * D + 4 * B * Sq * D),
        ),
    )(q_in, k_in, v_in, mask_add, wo_bf16, b_out)


# ----------------------------------------------------------------------------
# Parameters & forward wrapper
# ----------------------------------------------------------------------------
def init_params(key, d_model):
    """4 linear layers (d_model -> d_model). Weights stored as (in, out), f32."""
    ks = jax.random.split(key, 8)
    params = []
    scale = 1.0 / math.sqrt(d_model)
    for i in range(4):
        w = jax.random.uniform(ks[2 * i], (d_model, d_model), jnp.float32,
                               -scale, scale)
        b = jax.random.uniform(ks[2 * i + 1], (d_model,), jnp.float32,
                               -scale, scale)
        params.append((w, b))
    return params


def prepare_mha_params(params, h):
    """Ahead-of-time (free) parameter prep: fold 1/sqrt(d_k) into the Q
    projection, fuse QKV / KV weights, pre-cast all matmul weights to bf16."""
    (wq, bq), (wk, bk), (wv, bv), (wo, bo) = params
    d_model = wq.shape[0]
    inv = 1.0 / math.sqrt(d_model // h)
    wq_s, bq_s = wq * inv, bq * inv
    bf = jnp.bfloat16
    return {
        "w_qkv": jnp.concatenate([wq_s, wk, wv], axis=1).astype(bf),  # (D, 3D)
        "b_qkv": jnp.concatenate([bq_s, bk, bv], axis=0),             # (3D,)
        "w_kv": jnp.concatenate([wk, wv], axis=1).astype(bf),         # (D, 2D)
        "b_kv": jnp.concatenate([bk, bv], axis=0),                    # (2D,)
        "w_q": wq_s.astype(bf), "b_q": bq_s,
        "w_k": wk.astype(bf), "b_k": bk,
        "w_v": wv.astype(bf), "b_v": bv,
        "w_out": wo.astype(bf),                                       # (D, D)
        "b_out": bo.reshape(1, d_model),                              # (1, D)
    }


def multi_headed_attention(prep, h, query, key, value, mask=None):
    """Forward pass matching the PyTorch module (dropout = identity / eval)."""
    B, Sq, D = query.shape
    Sk = key.shape[1]

    # Compact additive mask built once in f32: hoists the ==0 compare out of the
    # per-head kernel loop; (B,1,Sk) key masks stay compact, (B,Sq,Sk) masks are
    # Sq-tiled by the attention grid.
    if mask is None:
        mask_add = jnp.zeros((B, 1, Sk), jnp.float32)
    else:
        m = mask if mask.ndim == 3 else mask[:, None, :]
        mask_add = jnp.where(m == 0, jnp.float32(_NEG_INF), jnp.float32(0.0))

    fused_cols = (D % 128 == 0)  # in-kernel column blocks need lane-aligned D

    if (query is key) and (query is value):
        # Self-attention: one fused QKV matmul (x read once, 3x wider MXU N)
        # emitted in bf16 and fed straight into attention (q/k/v picked out by
        # BlockSpec column index — no wrapper slicing / extra HBM round trip).
        qkv = linear_pallas(query.reshape(B * Sq, D), prep["w_qkv"],
                            prep["b_qkv"], out_dtype=jnp.bfloat16)
        qkv = qkv.reshape(B, Sq, 3 * D)
        if fused_cols:
            q_in = k_in = v_in = qkv
            q_col, k_col, v_col = 0, 1, 2
        else:
            # TODO(synk): wrapper slicing costs an extra HBM round trip; only
            # taken when d_model is not a multiple of 128.
            q_in = qkv[:, :, 0 * D:1 * D]
            k_in = qkv[:, :, 1 * D:2 * D]
            v_in = qkv[:, :, 2 * D:3 * D]
            q_col = k_col = v_col = 0
    else:
        q_in = linear_pallas(query.reshape(B * Sq, D), prep["w_q"], prep["b_q"],
                             out_dtype=jnp.bfloat16).reshape(B, Sq, D)
        q_col = 0
        if key is value:
            # Cross-attention with shared memory: fused K/V projection.
            kv = linear_pallas(key.reshape(B * Sk, D), prep["w_kv"],
                               prep["b_kv"], out_dtype=jnp.bfloat16)
            kv = kv.reshape(B, Sk, 2 * D)
            if fused_cols:
                k_in = v_in = kv
                k_col, v_col = 0, 1
            else:
                k_in, v_in = kv[:, :, 0:D], kv[:, :, D:2 * D]
                k_col = v_col = 0
        else:
            k_in = linear_pallas(key.reshape(B * Sk, D), prep["w_k"],
                                 prep["b_k"],
                                 out_dtype=jnp.bfloat16).reshape(B, Sk, D)
            v_in = linear_pallas(value.reshape(B * Sk, D), prep["w_v"],
                                 prep["b_v"],
                                 out_dtype=jnp.bfloat16).reshape(B, Sk, D)
            k_col = v_col = 0

    # Attention + fused output projection (x @ W_out + b_out) in one kernel.
    return attention_pallas(q_in, k_in, v_in, mask_add, prep["w_out"],
                            prep["b_out"], num_heads=h, d_model=D,
                            q_col=q_col, k_col=k_col, v_col=v_col)


# ----------------------------------------------------------------------------
# Pure-JAX f32 reference (un-fused, un-folded parameters)
# ----------------------------------------------------------------------------
def reference(params, h, query, key, value, mask=None):
    B, Sq, D = query.shape
    d_k = D // h

    def project(x, w, b):
        y = x @ w + b
        return y.reshape(x.shape[0], x.shape[1], h, d_k).transpose(0, 2, 1, 3)

    q = project(query, *params[0])
    k = project(key, *params[1])
    v = project(value, *params[2])
    scores = jnp.einsum("bhqd,bhkd->bhqk", q, k) / math.sqrt(d_k)
    if mask is not None:
        m = mask if mask.ndim == 3 else mask[:, None, :]
        scores = jnp.where(m[:, None] == 0, _NEG_INF, scores)
    p = jax.nn.softmax(scores, axis=-1)
    x = jnp.einsum("bhqk,bhkd->bhqd", p, v)
    x = x.transpose(0, 2, 1, 3).reshape(B, Sq, D)
    return x @ params[3][0] + params[3][1]


# ----------------------------------------------------------------------------
if __name__ == "__main__":
    B, S, D, H = 2, 8, 128, 4   # batch, seq, d_model, heads  (d_k = 32)

    root = jax.random.PRNGKey(0)
    k_par, k_x, k_mem, _ = jax.random.split(root, 4)

    params = init_params(k_par, D)
    prep = prepare_mha_params(params, H)

    x = jax.random.normal(k_x, (B, S, D), jnp.float32)

    # bf16 MXU operands => compare against the f32 reference at a bf16-level bar
    TOL = dict(atol=3e-2, rtol=3e-2)

    # --- 1) self-attention with a (B,1,S) key mask (fused QKV path) ---
    mask = jnp.ones((B, 1, S), jnp.int32).at[1, 0, -2:].set(0)
    out = jax.block_until_ready(multi_headed_attention(prep, H, x, x, x, mask))
    ref = reference(params, H, x, x, x, mask)
    assert out.shape == (B, S, D)
    assert jnp.allclose(out, ref, **TOL), "self-attn mismatch"

    # --- 2) cross-attention (separate Q, fused KV), no mask ---
    mem = jax.random.normal(k_mem, (B, S, D), jnp.float32)
    out2 = jax.block_until_ready(multi_headed_attention(prep, H, x, mem, mem, None))
    ref2 = reference(params, H, x, mem, mem, None)
    assert jnp.allclose(out2, ref2, **TOL), "cross-attn mismatch"

    # --- 3) self-attention with a full (B,S,S) causal mask (Sq-tiled mask) ---
    causal = jnp.broadcast_to(jnp.tril(jnp.ones((S, S), jnp.int32)), (B, S, S))
    out3 = jax.block_until_ready(multi_headed_attention(prep, H, x, x, x, causal))
    ref3 = reference(params, H, x, x, x, causal)
    assert jnp.allclose(out3, ref3, **TOL), "causal-mask mismatch"

    print("KERNEL_OK")
</pallas_src>

<mosaic_0001>
module attributes {stable_mosaic.version = 11 : i64} {
  func.func @_linear_kernel(%arg0: i32, %arg1: i32, %arg2: i32, %arg3: memref<16x128xf32, #tpu.memory_space<vmem>>, %arg4: memref<128x128xbf16, #tpu.memory_space<vmem>>, %arg5: memref<1x128xf32, #tpu.memory_space<vmem>>, %arg6: memref<16x128xbf16, #tpu.memory_space<vmem>>, %arg7: memref<16x128xf32, #tpu.memory_space<vmem>>) attributes {dimension_semantics = [#tpu.dimension_semantics<parallel>, #tpu.dimension_semantics<parallel>, #tpu.dimension_semantics<arbitrary>], iteration_bounds = array<i64: 1, 3, 1>, scalar_prefetch = 0 : i64, scratch_operands = 1 : i64, tpu.core_type = #tpu.core_type<tc>, window_params = [{transform_indices = @transform_0, window_bounds = array<i64: 16, 128>}, {transform_indices = @transform_1, window_bounds = array<i64: 128, 128>}, {transform_indices = @transform_2, window_bounds = array<i64: 1, 128>}, {transform_indices = @transform_3, window_bounds = array<i64: 16, 128>}]} {
    %c0_i32 = arith.constant 0 : i32
    %0 = arith.cmpi eq, %arg2, %c0_i32 : i32
    %1 = arith.extui %0 : i1 to i32
    %c0_i32_0 = arith.constant 0 : i32
    %2 = arith.cmpi ne, %1, %c0_i32_0 : i32
    scf.if %2 {
      %cst_10 = arith.constant 0.000000e+00 : f32
      %13 = vector.broadcast %cst_10 : f32 to vector<16x128xf32>
      %c0_11 = arith.constant 0 : index
      %c0_12 = arith.constant 0 : index
      %14 = vector.load %arg7[%c0_11, %c0_12] : memref<16x128xf32, #tpu.memory_space<vmem>>, vector<16x128xf32>
      tpu.vector_store %arg7[%c0_11, %c0_12], %13 {strides = array<i32>} : memref<16x128xf32, #tpu.memory_space<vmem>>, vector<16x128xf32>,
    } else {
    }
    %c0 = arith.constant 0 : index
    %c0_1 = arith.constant 0 : index
    %3 = vector.load %arg7[%c0, %c0_1] : memref<16x128xf32, #tpu.memory_space<vmem>>, vector<16x128xf32>
    %c0_2 = arith.constant 0 : index
    %c0_3 = arith.constant 0 : index
    %4 = vector.load %arg3[%c0_2, %c0_3] : memref<16x128xf32, #tpu.memory_space<vmem>>, vector<16x128xf32>
    %5 = arith.truncf %4 : vector<16x128xf32> to vector<16x128xbf16>
    %c0_4 = arith.constant 0 : index
    %c0_5 = arith.constant 0 : index
    %6 = vector.load %arg4[%c0_4, %c0_5] : memref<128x128xbf16, #tpu.memory_space<vmem>>, vector<128x128xbf16>
    %cst = arith.constant dense<0.000000e+00> : vector<16x128xf32>
    %7 = tpu.matmul %5, %6, %cst {dimension_numbers = #tpu.dot_dimension_numbers<[1], [0], [0], [1], [0, 0, 1, 1], [], []>} : vector<16x128xbf16>, vector<128x128xbf16>, vector<16x128xf32> -> vector<16x128xf32>
    %8 = arith.addf %3, %7 : vector<16x128xf32>
    %c0_6 = arith.constant 0 : index
    %c0_7 = arith.constant 0 : index
    %9 = vector.load %arg7[%c0_6, %c0_7] : memref<16x128xf32, #tpu.memory_space<vmem>>, vector<16x128xf32>
    tpu.vector_store %arg7[%c0_6, %c0_7], %8 {strides = array<i32>} : memref<16x128xf32, #tpu.memory_space<vmem>>, vector<16x128xf32>,
    %c0_i32_8 = arith.constant 0 : i32
    %10 = arith.cmpi eq, %arg2, %c0_i32_8 : i32
    %11 = arith.extui %10 : i1 to i32
    %c0_i32_9 = arith.constant 0 : i32
    %12 = arith.cmpi ne, %11, %c0_i32_9 : i32
    scf.if %12 {
      %c0_10 = arith.constant 0 : index
      %c0_11 = arith.constant 0 : index
      %13 = vector.load %arg7[%c0_10, %c0_11] : memref<16x128xf32, #tpu.memory_space<vmem>>, vector<16x128xf32>
      %c0_12 = arith.constant 0 : index
      %c0_13 = arith.constant 0 : index
      %14 = vector.load %arg5[%c0_12, %c0_13] : memref<1x128xf32, #tpu.memory_space<vmem>>, vector<1x128xf32>
      %15 = vector.broadcast %14 : vector<1x128xf32> to vector<16x128xf32>
      %16 = arith.addf %13, %15 : vector<16x128xf32>
      %17 = arith.truncf %16 : vector<16x128xf32> to vector<16x128xbf16>
      %c0_14 = arith.constant 0 : index
      %c0_15 = arith.constant 0 : index
      %18 = vector.load %arg6[%c0_14, %c0_15] : memref<16x128xbf16, #tpu.memory_space<vmem>>, vector<16x128xbf16>
      tpu.vector_store %arg6[%c0_14, %c0_15], %17 {strides = array<i32>} : memref<16x128xbf16, #tpu.memory_space<vmem>>, vector<16x128xbf16>,
    } else {
    }
    return
  }
  func.func @transform_0(%arg0: i32, %arg1: i32, %arg2: i32) -> (i32, i32) {
    %c0_i32 = arith.constant 0 : i32
    return %arg0, %arg2 : i32, i32
  }
  func.func @transform_1(%arg0: i32, %arg1: i32, %arg2: i32) -> (i32, i32) {
    %c0_i32 = arith.constant 0 : i32
    return %arg2, %arg1 : i32, i32
  }
  func.func @transform_2(%arg0: i32, %arg1: i32, %arg2: i32) -> (i32, i32) {
    %c0_i32 = arith.constant 0 : i32
    %c0_i32_0 = arith.constant 0 : i32
    return %c0_i32, %arg1 : i32, i32
  }
  func.func @transform_3(%arg0: i32, %arg1: i32, %arg2: i32) -> (i32, i32) {
    %c0_i32 = arith.constant 0 : i32
    return %arg0, %arg1 : i32, i32
  }
}

</mosaic_0001>

<llo_original>
// kernel: tpu_custom_call.1
$region0: #{tpu_custom_call.1}
  #allocation0 [shape = 'u32[]', space=smem, size = 0x4, offset = 0x4, fixed_abs, tag = 'smem constant byte address 0x4 - core index']
  #allocation1 [shape = 'u32[72,128]{1,0:T(1,128)}', space=vmem, size = 0x9000, scoped, tag = 'internal scratch']
  #allocation2 [shape = 'f32[16,128]{1,0:T(8,128)}', space=vmem, size = 0x2000, scoped, tag = 'scratch operand']
  %s0 = inlined_call_operand.hbm [shape: f32[16,128], index: 0, kind: input, shape index: {}]
  %s1 = inlined_call_operand.hbm [shape: bf16[128,384], index: 1, kind: input, shape index: {}]
  %s2 = inlined_call_operand.hbm [shape: f32[1,384], index: 2, kind: input, shape index: {}]
  %s3 = inlined_call_operand.hbm [shape: bf16[16,384], index: 3, kind: output, shape index: {}]
  %s4 = sld [smem:[#allocation0]]
  $region65: #{tpu_custom_call.1} parent=0
    _
  %s6 = ssub.s32 1, %s4
  %s7 = scalar_select 0, %s6, %s4
  $region1: #{tpu_custom_call.1} parent=0
    #allocation3 [shape = 'u8[8192]{0}', space=vmem, size = 0x2000, scoped, tag = 'input window, operand 0, single buffered']
    #allocation4 [shape = 's32[2]{0}', space=sflag, size = 0x8, scoped, tag = 'scoped memory for tpu_custom_call.1']
    #allocation5 [shape = 's32[2]{0}', space=sflag, size = 0x8, scoped, tag = 'scoped memory for tpu_custom_call.1']
    #allocation6 [shape = 'u8[65536]{0}', space=vmem, size = 0x10000, scoped, tag = 'input window, operand 1']
    #allocation7 [shape = 's32[2]{0}', space=sflag, size = 0x8, scoped, tag = 'scoped memory for tpu_custom_call.1']
    #allocation8 [shape = 'u8[1024]{0}', space=vmem, size = 0x400, scoped, tag = 'input window, operand 2']
    #allocation9 [shape = 'u8[8192]{0}', space=vmem, size = 0x2000, scoped, tag = 'output window, operand 0']
    %8 = vsyncpa [#allocation4], 0
    %9 = vsyncpa [#allocation7], 0
    %s10 = scalar_lea.sflag [#allocation7], 1
    %11 = vsyncpa %s10, 0
    %12 = vsyncpa [#allocation5], 0
    %s13 = scalar_lea.sflag [#allocation5], 1
    %14 = vsyncpa %s13, 0
    loop: start=0, step=1, limit=5
    $region2: #{tpu_custom_call.1} parent=1 // loop_pre_header
      _
    $region3: #{tpu_custom_call.1} parent=1 // loop_header
      %s16 = sphi 0, %s20
      %p17 = scmp.ge.s32.totalorder %s16, 5
      %s23 = sphi 0, %s42
      %s24 = sphi 0, %s38
      %s25 = sphi 0, %s34
      %s26 = sphi 0, %s23
      %s27 = sphi 0, %s24
      %s28 = sphi 0, %s25
      %s29 = sphi 0, %s26
      %s30 = sphi 0, %s27
      %s31 = sphi 0, %s28
      %s47 = sphi 0, %s49
      %s50 = sphi 0, %s47
      %s51 = sphi 0, %s50
      %s67 = sphi 0, %s51
      %s75 = sphi 0, %s77
      %s78 = sphi 0, %s75
      %s79 = sphi 0, %s78
      %s95 = sphi 0, %s79
      %s101 = sphi 0, %s103
      %s104 = sphi 0, %s101
      %s105 = sphi 0, %s104
      %s121 = sphi 0, %s105
      %s129 = sphi 0, %s131
      %s132 = sphi 0, %s129
      %s133 = sphi 0, %s132
      %s149 = sphi 0, %s133
    $region4: #{tpu_custom_call.1} parent=1 // loop_header_branch
      %19 = sbr.rel (%p17) target = $region8
    $region5: #{tpu_custom_call.1} parent=1 // loop_body
      %s21 = ssub.s32 %s16, 1
      %s22 = ssub.s32 %s16, 2
      %s32 = sadd.s32 1, %s25
      %p33 = scmp.ge.s32.totalorder %s32, 1
      %s34 = scalar_select %p33, 0, %s32
      %s35 = sadd.s32 1, %s24
      %s36 = scalar_select %p33, %s35, %s24
      %p37 = scmp.ge.s32.totalorder %s36, 3
      %s38 = scalar_select %p37, 0, %s36
      %s39 = sadd.s32 1, %s23
      %s40 = scalar_select %p37, %s39, %s23
      %p41 = scmp.ge.s32.totalorder %s40, 1
      %s42 = scalar_select %p41, 0, %s40
      %s43 = ssub.s32 %s23, %s42
      %s44 = ssub.s32 %s25, %s34
      %s45 = sor.u32 %s43, %s44
      %p46 = scmp.eq.s32.totalorder %s45, 0
      %s48 = sadd.s32 %s47, 1
      %s49 = scalar_select %p46, %s47, %s48
      %p52 = pneg %p46
      %p53 = scmp.eq.s32.totalorder %s16, 2
      %p54 = por %p52, %p53
      %p55 = scmp.ne.s32.totalorder %s47, %s50
      %p56 = scmp.eq.s32.totalorder %s16, 0
      %p57 = por %p55, %p56
      %p58 = scmp.ne.s32.totalorder %s47, %s50
      %p59 = scmp.eq.s32.totalorder %s21, 2
      %p60 = por %p58, %p59
      %p61 = scmp.ne.s32.totalorder %s50, %s51
      %p62 = scmp.eq.s32.totalorder %s21, 0
      %p63 = por %p61, %p62
      %p64 = scmp.ne.s32.totalorder %s50, %s51
      %p65 = scmp.eq.s32.totalorder %s22, 2
      %p66 = por %p64, %p65
      %p68 = scmp.ne.s32.totalorder %s51, %s67
      %p69 = scmp.eq.s32.totalorder %s22, 0
      %p70 = por %p68, %p69
      %s71 = ssub.s32 %s25, %s34
      %s72 = ssub.s32 %s24, %s38
      %s73 = sor.u32 %s71, %s72
      %p74 = scmp.eq.s32.totalorder %s73, 0
      %s76 = sadd.s32 %s75, 1
      %s77 = scalar_select %p74, %s75, %s76
      %p80 = pneg %p74
      %p81 = scmp.eq.s32.totalorder %s16, 2
      %p82 = por %p80, %p81
      %p83 = scmp.ne.s32.totalorder %s75, %s78
      %p84 = scmp.eq.s32.totalorder %s16, 0
      %p85 = por %p83, %p84
      %p86 = scmp.ne.s32.totalorder %s75, %s78
      %p87 = scmp.eq.s32.totalorder %s21, 2
      %p88 = por %p86, %p87
      %p89 = scmp.ne.s32.totalorder %s78, %s79
      %p90 = scmp.eq.s32.totalorder %s21, 0
      %p91 = por %p89, %p90
      %p92 = scmp.ne.s32.totalorder %s78, %s79
      %p93 = scmp.eq.s32.totalorder %s22, 2
      %p94 = por %p92, %p93
      %p96 = scmp.ne.s32.totalorder %s79, %s95
      %p97 = scmp.eq.s32.totalorder %s22, 0
      %p98 = por %p96, %p97
      %s99 = ssub.s32 %s24, %s38
      %p100 = scmp.eq.s32.totalorder %s99, 0
      %s102 = sadd.s32 %s101, 1
      %s103 = scalar_select %p100, %s101, %s102
      %p106 = pneg %p100
      %p107 = scmp.eq.s32.totalorder %s16, 2
      %p108 = por %p106, %p107
      %p109 = scmp.ne.s32.totalorder %s101, %s104
      %p110 = scmp.eq.s32.totalorder %s16, 0
      %p111 = por %p109, %p110
      %p112 = scmp.ne.s32.totalorder %s101, %s104
      %p113 = scmp.eq.s32.totalorder %s21, 2
      %p114 = por %p112, %p113
      %p115 = scmp.ne.s32.totalorder %s104, %s105
      %p116 = scmp.eq.s32.totalorder %s21, 0
      %p117 = por %p115, %p116
      %p118 = scmp.ne.s32.totalorder %s104, %s105
      %p119 = scmp.eq.s32.totalorder %s22, 2
      %p120 = por %p118, %p119
      %p122 = scmp.ne.s32.totalorder %s105, %s121
      %p123 = scmp.eq.s32.totalorder %s22, 0
      %p124 = por %p122, %p123
      %s125 = ssub.s32 %s23, %s42
      %s126 = ssub.s32 %s24, %s38
      %s127 = sor.u32 %s125, %s126
      %p128 = scmp.eq.s32.totalorder %s127, 0
      %s130 = sadd.s32 %s129, 1
      %s131 = scalar_select %p128, %s129, %s130
      %p134 = pneg %p128
      %p135 = scmp.eq.s32.totalorder %s16, 2
      %p136 = por %p134, %p135
      %p137 = scmp.ne.s32.totalorder %s129, %s132
      %p138 = scmp.eq.s32.totalorder %s16, 0
      %p139 = por %p137, %p138
      %p140 = scmp.ne.s32.totalorder %s129, %s132
      %p141 = scmp.eq.s32.totalorder %s21, 2
      %p142 = por %p140, %p141
      %p143 = scmp.ne.s32.totalorder %s132, %s133
      %p144 = scmp.eq.s32.totalorder %s21, 0
      %p145 = por %p143, %p144
      %p146 = scmp.ne.s32.totalorder %s132, %s133
      %p147 = scmp.eq.s32.totalorder %s22, 2
      %p148 = por %p146, %p147
      %p150 = scmp.ne.s32.totalorder %s133, %s149
      %p151 = scmp.eq.s32.totalorder %s22, 0
      %p152 = por %p150, %p151
      %p153 = scmp.le.s32.totalorder 1, %s16
      %p154 = scmp.lt.s32.totalorder %s16, 4
      %p155 = pnand %p153, %p154
      %p156 = pneg %p155
      // Predicated region
      $region9: #{tpu_custom_call.1} parent=5 // pred_check
        _
      $region10: #{tpu_custom_call.1} parent=5 // pred_check_branch
        %158 = sbr.rel (%p155) target = $region12
      $region11: #{tpu_custom_call.1} parent=5 // pred_region
        %s159 = ssub.s32 %s16, 1
        // Predicated region
        $region13: #{tpu_custom_call.1} parent=11 // pred_check
          %p160 = pneg %p63
        $region14: #{tpu_custom_call.1} parent=11 // pred_check_branch
          %162 = sbr.rel (%p160) target = $region16
        $region15: #{tpu_custom_call.1} parent=11 // pred_region
          %s163 = smul.u32 2, %s26
          %165 = vsyncadd [#allocation4], 0
          %s166 = sadd.s32 %s28, %s163
          %s167 = smul.addr %s166, 8
          %s168 = scalar_lea.hbm %s0, %s167
          %s169 = sshll.u32 %s168, 4
          %s170 = int_to_ptr.hbm [resolvable:$true] %s169
          %s171 = sshll.u32 [#allocation3], 4
          %s172 = int_to_ptr.vmem [resolvable:$true] %s171
          %177 = dma.hbm_to_vmem [thread:$0]  %s170, 256, %s172, [#allocation4], 128, 128, 8
        $region16: #{tpu_custom_call.1} parent=11 // pred_fallthru
          _
      $region12: #{tpu_custom_call.1} parent=5 // pred_fallthru
        _
      %p178 = scmp.lt.s32.totalorder %s16, 3
      // Predicated region
      $region17: #{tpu_custom_call.1} parent=5 // pred_check
        %p179 = pneg %p178
      $region18: #{tpu_custom_call.1} parent=5 // pred_check_branch
        %181 = sbr.rel (%p179) target = $region20
      $region19: #{tpu_custom_call.1} parent=5 // pred_region
        // Predicated region
        $region21: #{tpu_custom_call.1} parent=19 // pred_check
          %p182 = pneg %p85
        $region22: #{tpu_custom_call.1} parent=19 // pred_check_branch
          %184 = sbr.rel (%p182) target = $region24
        $region23: #{tpu_custom_call.1} parent=19 // pred_region
          %s185 = sand.u32 %s16, 1
          %s186 = scalar_lea.sflag [#allocation7], %s185
          %s187 = sand.u32 %s75, 1
          %s188 = smul.addr %s187, 64
          %s189 = scalar_lea.vmem [#allocation6], %s188
          %s190 = smul.u32 16, %s25
          %192 = vsyncadd %s186, 0
          %s193 = smul.addr %s190, 3
          %s194 = sadd.s32 %s24, %s193
          %s195 = smul.addr %s194, 4
          %s196 = scalar_lea.hbm %s1, %s195
          %s197 = sshll.u32 %s196, 4
          %s198 = int_to_ptr.hbm [resolvable:$true] %s197
          %s199 = sshll.u32 %s189, 4
          %s200 = int_to_ptr.vmem [resolvable:$true] %s199
          %205 = dma.hbm_to_vmem [thread:$0]  %s198, 1024, %s200, %s186, 192, 64, 4
        $region24: #{tpu_custom_call.1} parent=19 // pred_fallthru
          _
        // Predicated region
        $region25: #{tpu_custom_call.1} parent=19 // pred_check
          %p206 = pneg %p111
        $region26: #{tpu_custom_call.1} parent=19 // pred_check_branch
          %208 = sbr.rel (%p206) target = $region28
        $region27: #{tpu_custom_call.1} parent=19 // pred_region
          %s209 = sand.u32 %s16, 1
          %s210 = scalar_lea.sflag [#allocation7], %s209
          %s211 = sand.u32 %s101, 1
          %s212 = scalar_lea.vmem [#allocation8], %s211
          %214 = vsyncadd %s210, 0
          %s215 = scalar_lea.hbm %s2, %s24
          %s217 = sshll.u32 %s215, 4
          %s218 = int_to_ptr.hbm [resolvable:$true] %s217
          %s219 = sshll.u32 %s212, 4
          %s220 = int_to_ptr.vmem [resolvable:$true] %s219
          %222 = dma.hbm_to_vmem [thread:$0]  %s218, 16, %s220, %s210
        $region28: #{tpu_custom_call.1} parent=19 // pred_fallthru
          _
      $region20: #{tpu_custom_call.1} parent=5 // pred_fallthru
        _
      %p223 = scmp.le.s32.totalorder 1, %s16
      %p224 = scmp.lt.s32.totalorder %s16, 4
      %p225 = pnand %p223, %p224
      %p226 = pneg %p225
      // Predicated region
      $region29: #{tpu_custom_call.1} parent=5 // pred_check
        _
      $region30: #{tpu_custom_call.1} parent=5 // pred_check_branch
        %228 = sbr.rel (%p225) target = $region32
      $region31: #{tpu_custom_call.1} parent=5 // pred_region
        %s229 = ssub.s32 %s16, 1
        // Predicated region
        $region33: #{tpu_custom_call.1} parent=31 // pred_check
          %p230 = pneg %p63
        $region34: #{tpu_custom_call.1} parent=31 // pred_check_branch
          %232 = sbr.rel (%p230) target = $region36
        $region35: #{tpu_custom_call.1} parent=31 // pred_region
          %234 = dma.done [#allocation4], 256
        $region36: #{tpu_custom_call.1} parent=31 // pred_fallthru
          _
        %s235 = sand.u32 %s21, 1
        %s236 = scalar_lea.sflag [#allocation7], %s235
        %s237 = sand.u32 %s78, 1
        %s238 = smul.addr %s237, 64
        %s239 = scalar_lea.vmem [#allocation6], %s238
        // Predicated region
        $region37: #{tpu_custom_call.1} parent=31 // pred_check
          %p240 = pneg %p91
        $region38: #{tpu_custom_call.1} parent=31 // pred_check_branch
          %242 = sbr.rel (%p240) target = $region40
        $region39: #{tpu_custom_call.1} parent=31 // pred_region
          %244 = dma.done %s236, 1024
        $region40: #{tpu_custom_call.1} parent=31 // pred_fallthru
          _
        %s245 = sand.u32 %s21, 1
        %s246 = scalar_lea.sflag [#allocation7], %s245
        %s247 = sand.u32 %s104, 1
        %s248 = scalar_lea.vmem [#allocation8], %s247
        // Predicated region
        $region41: #{tpu_custom_call.1} parent=31 // pred_check
          %p249 = pneg %p117
        $region42: #{tpu_custom_call.1} parent=31 // pred_check_branch
          %251 = sbr.rel (%p249) target = $region44
        $region43: #{tpu_custom_call.1} parent=31 // pred_region
          %253 = dma.done %s246, 16
        $region44: #{tpu_custom_call.1} parent=31 // pred_fallthru
          _
        %p254 = pneg %p63
        %p255 = pneg %p60
        %s256 = sand.u32 %s21, 1
        %s257 = scalar_lea.sflag [#allocation7], %s256
        %s258 = sand.u32 %s78, 1
        %s259 = smul.addr %s258, 64
        %s260 = scalar_lea.vmem [#allocation6], %s259
        %p261 = pneg %p91
        %p262 = pneg %p88
        %s263 = sand.u32 %s21, 1
        %s264 = scalar_lea.sflag [#allocation7], %s263
        %s265 = sand.u32 %s104, 1
        %s266 = scalar_lea.vmem [#allocation8], %s265
        %p267 = pneg %p117
        %p268 = pneg %p114
        %p269 = pneg %p145
        %p270 = pneg %p142
        %s271 = sand.u32 %s132, 1
        %s272 = scalar_lea.sflag [#allocation5], %s271
        %s273 = sand.u32 %s132, 1
        %s274 = smul.addr %s273, 8
        %s275 = scalar_lea.vmem [#allocation9], %s274
        %s276 = smul.u32 2, %s26
        %s277 = smul.u32 16, %s28
        %s278 = smul.u32 2, %s26
        %p279 = scmp.eq.s32.totalorder %s28, 0
        // Predicated region
        $region45: #{tpu_custom_call.1} parent=31 // pred_check
          %p280 = pneg %p279
        $region46: #{tpu_custom_call.1} parent=31 // pred_check_branch
          %282 = sbr.rel (%p280) target = $region48
        $region47: #{tpu_custom_call.1} parent=31 // pred_region
          %283 = vst [vmem:[#allocation2] sm:$0xff] 0.0
          %284 = vst [vmem:[#allocation2 + $0x8] sm:$0xff] 0.0
        $region48: #{tpu_custom_call.1} parent=31 // pred_fallthru
          _
        %v285 = vld [vmem:[#allocation2] sm:$0xff]
        %v286 = vld [vmem:[#allocation2 + $0x8] sm:$0xff]
        %v287 = vld [vmem:[#allocation3] sm:$0xff]
        %v288 = vld [vmem:[#allocation3 + $0x8] sm:$0xff]
        %v289 = vpack.c.bf16 %v288, %v287
        %v290 = vld [vmem:[%s239] sm:$0xf]
        %v291 = vld [vmem:[%s239 + $0x4] sm:$0xf]
        %v292 = vld [vmem:[%s239 + $0x8] sm:$0xf]
        %v293 = vld [vmem:[%s239 + $0xc] sm:$0xf]
        %v294 = vld [vmem:[%s239 + $0x10] sm:$0xf]
        %v295 = vld [vmem:[%s239 + $0x14] sm:$0xf]
        %v296 = vld [vmem:[%s239 + $0x18] sm:$0xf]
        %v297 = vld [vmem:[%s239 + $0x1c] sm:$0xf]
        %v298 = vld [vmem:[%s239 + $0x20] sm:$0xf]
        %v299 = vld [vmem:[%s239 + $0x24] sm:$0xf]
        %v300 = vld [vmem:[%s239 + $0x28] sm:$0xf]
        %v301 = vld [vmem:[%s239 + $0x2c] sm:$0xf]
        %v302 = vld [vmem:[%s239 + $0x30] sm:$0xf]
        %v303 = vld [vmem:[%s239 + $0x34] sm:$0xf]
        %v304 = vld [vmem:[%s239 + $0x38] sm:$0xf]
        %v305 = vld [vmem:[%s239 + $0x3c] sm:$0xf]
        %v322 = vunpack.c.l.b16 %v290
        %v323 = vunpack.c.l.b16 %v291
        %v324 = vunpack.c.l.b16 %v292
        %v325 = vunpack.c.l.b16 %v293
        %v326 = vunpack.c.l.b16 %v294
        %v327 = vunpack.c.l.b16 %v295
        %v328 = vunpack.c.l.b16 %v296
        %v329 = vunpack.c.l.b16 %v297
        %v330 = vunpack.c.l.b16 %v298
        %v331 = vunpack.c.l.b16 %v299
        %v332 = vunpack.c.l.b16 %v300
        %v333 = vunpack.c.l.b16 %v301
        %v334 = vunpack.c.l.b16 %v302
        %v335 = vunpack.c.l.b16 %v303
        %v336 = vunpack.c.l.b16 %v304
        %v337 = vunpack.c.l.b16 %v305
        %v338 = vpack.c.b16 %v323, %v322
        %v339 = vpack.c.b16 %v325, %v324
        %v340 = vpack.c.b16 %v327, %v326
        %v341 = vpack.c.b16 %v329, %v328
        %v342 = vpack.c.b16 %v331, %v330
        %v343 = vpack.c.b16 %v333, %v332
        %v344 = vpack.c.b16 %v335, %v334
        %v345 = vpack.c.b16 %v337, %v336
        %354 = vmatpush.bf16.msra.mxu0 %v345
        %355 = vmatpush.bf16.msra.mxu0 %v344
        %356 = vmatpush.bf16.msra.mxu0 %v343
        %357 = vmatpush.bf16.msra.mxu0 %v342
        %358 = vmatpush.bf16.msra.mxu0 %v341
        %359 = vmatpush.bf16.msra.mxu0 %v340
        %360 = vmatpush.bf16.msra.mxu0 %v339
        %361 = vmatpush.bf16.msra.mxu0 %v338
        %362 = vmatmul.bf16.gmra.mxu0 %v289
        %v363 = vpop.f32.mrf.mxu0
        %v364 = vadd.f32 0.0, %v363
        %v365 = vpop.f32.mrf.mxu0
        %v366 = vadd.f32 0.0, %v365
        %367 = vdwg.mxu0
        %v368 = vadd.f32 %v285, %v364
        %v369 = vadd.f32 %v286, %v366
        %370 = vst [vmem:[#allocation2] sm:$0xff] %v368
        %371 = vst [vmem:[#allocation2 + $0x8] sm:$0xff] %v369
        // Predicated region
        $region49: #{tpu_custom_call.1} parent=31 // pred_check
          %p372 = pneg %p279
        $region50: #{tpu_custom_call.1} parent=31 // pred_check_branch
          %374 = sbr.rel (%p372) target = $region52
        $region51: #{tpu_custom_call.1} parent=31 // pred_region
          %v375 = vld [vmem:[#allocation2] sm:$0xff]
          %v376 = vld [vmem:[#allocation2 + $0x8] sm:$0xff]
          %v377 = vld [vmem:[%s248] sm:$0x1]
          %v379 = vperm.slane %v377, 0
          %v381 = vadd.f32 %v375, %v379
          %v382 = vadd.f32 %v376, %v379
          %v383 = vpack.c.bf16 %v381, %v381
          %v384 = vpack.c.bf16 %v382, %v382
          %385 = vst [vmem:[%s275] sm:$0xf] %v383
          %386 = vst [vmem:[%s275 + $0x4] sm:$0xf] %v384
        $region52: #{tpu_custom_call.1} parent=31 // pred_fallthru
          _
        %s387 = sand.u32 %s132, 1
        %s388 = scalar_lea.sflag [#allocation5], %s387
        %s389 = sand.u32 %s132, 1
        %s390 = smul.addr %s389, 8
        %s391 = scalar_lea.vmem [#allocation9], %s390
        // Predicated region
        $region53: #{tpu_custom_call.1} parent=31 // pred_check
          %p392 = pneg %p142
        $region54: #{tpu_custom_call.1} parent=31 // pred_check_branch
          %394 = sbr.rel (%p392) target = $region56
        $region55: #{tpu_custom_call.1} parent=31 // pred_region
          %s395 = smul.u32 2, %s26
          %397 = vsyncadd %s388, 0
          %s398 = smul.addr %s395, 3
          %s399 = sadd.s32 %s27, %s398
          %s400 = smul.addr %s399, 4
          %s401 = scalar_lea.hbm %s3, %s400
          %s402 = sshll.u32 %s391, 4
          %s403 = int_to_ptr.vmem [resolvable:$true] %s402
          %s404 = sshll.u32 %s401, 4
          %s405 = int_to_ptr.hbm [resolvable:$true] %s404
          %410 = dma.vmem_to_hbm [thread:$0]  %s403, 128, %s405, %s388, 64, 192, 4
        $region56: #{tpu_custom_call.1} parent=31 // pred_fallthru
          _
      $region32: #{tpu_custom_call.1} parent=5 // pred_fallthru
        _
      %p411 = scmp.le.s32.totalorder 2, %s16
      // Predicated region
      $region57: #{tpu_custom_call.1} parent=5 // pred_check
        %p412 = pneg %p411
      $region58: #{tpu_custom_call.1} parent=5 // pred_check_branch
        %414 = sbr.rel (%p412) target = $region60
      $region59: #{tpu_custom_call.1} parent=5 // pred_region
        %s415 = ssub.s32 %s16, 2
        // Predicated region
        $region61: #{tpu_custom_call.1} parent=59 // pred_check
          %p416 = pneg %p148
        $region62: #{tpu_custom_call.1} parent=59 // pred_check_branch
          %418 = sbr.rel (%p416) target = $region64
        $region63: #{tpu_custom_call.1} parent=59 // pred_region
          %s419 = sand.u32 %s133, 1
          %s420 = scalar_lea.sflag [#allocation5], %s419
          %s421 = sand.u32 %s133, 1
          %s422 = smul.addr %s421, 8
          %s423 = scalar_lea.vmem [#allocation9], %s422
          %425 = dma.done %s420, 128
        $region64: #{tpu_custom_call.1} parent=59 // pred_fallthru
          _
      $region60: #{tpu_custom_call.1} parent=5 // pred_fallthru
        _
    $region6: #{tpu_custom_call.1} parent=1 // loop_footer
      %s20 = sadd.s32 1, %s16
    $region7: #{tpu_custom_call.1} parent=1 // loop_footer_branch
      %15 = sbr.rel target = $region3
    $region8: #{tpu_custom_call.1} parent=1 // loop_exit
      _
    %426 = vsyncpa [#allocation4], 1
    %s427 = scalar_lea.sflag [#allocation4], 1
    %428 = vsyncpa %s427, 1
    %429 = vsyncpa [#allocation7], 1
    %s430 = scalar_lea.sflag [#allocation7], 1
    %431 = vsyncpa %s430, 1
    %432 = vsyncpa [#allocation5], 1
    %s433 = scalar_lea.sflag [#allocation5], 1
    %434 = vsyncpa %s433, 1

</llo_original>
